<compile_context>
chip_gen: v7x
topology: tpu7x:2x2x1
jax: 0.10.0
libtpu: 0.0.40
codegen_flags: <defaults>
</compile_context>

<pallas_src>
import functools

import jax
import jax.numpy as jnp
from jax.experimental import pallas as pl
from jax.experimental.pallas import tpu as pltpu


def _polarnet_kernel(x_ref, w1x_ref, w1y_ref, b1_ref, w2_ref, b2_ref, o_ref,
                     *, polar_in_kernel):
    xt = x_ref[...]                          # [2, TM]
    a = xt[0:1, :]                           # [1, TM]  (x coords, or r)
    b = xt[1:2, :]                           # [1, TM]  (y coords, or theta)
    if polar_in_kernel:
        r = jnp.sqrt(a * a + b * b)          # [1, TM]
        t = jnp.arctan2(b, a)                # [1, TM]
    else:
        r, t = a, b                          # already polar (wrapper fallback)

    # feed: Linear(2, H) as two rank-1 VPU updates. Weight slabs are already
    # lane-replicated [H, TM] (no per-step cross-lane broadcast); only r/t
    # need a cheap sublane broadcast.
    h = jnp.tanh(w1x_ref[...] * r + w1y_ref[...] * t + b1_ref[...])     # [H, TM]

    # hid: Linear(H, 1) as VPU multiply + sublane (XLU) reduction; output stays
    # lane-dense.  b2 is an SMEM scalar.
    z = jnp.sum(h * w2_ref[...], axis=0, keepdims=True) + b2_ref[0, 0]  # [1, TM]
    o_ref[...] = jax.nn.sigmoid(z)


def polarnet_forward(x, params, *, tm=8192, polar_in_kernel=True):
    """x: [N, 2] float32 cartesian input. Returns sigmoid output [N, 1]."""
    n, two = x.shape
    assert two == 2
    h = params["w1"].shape[0]

    # --- tile-size selection ------------------------------------------------
    # Multiple of 128, large (amortizes ~0.35us/step overhead), but clamped so
    # the grid has >= 2 steps whenever the batch allows it (v7x has 2 TCs and
    # "parallel" sharding needs >= 2 grid points to use them).
    n_ceil = 128 * pl.cdiv(n, 128)
    if n_ceil >= 256:
        half = max(128, (n_ceil // 2) // 128 * 128)
        tm_eff = max(128, min(tm, half))
    else:
        tm_eff = n_ceil
    n_pad = tm_eff * pl.cdiv(n, tm_eff)

    # --- input prep (single fused pad+transpose copy) -----------------------
    if polar_in_kernel:
        xp = x if n_pad == n else jnp.pad(x, ((0, n_pad - n), (0, 0)))
        xt = xp.T                                            # [2, n_pad]; pad fuses into transpose
    else:
        # TODO(synk): fallback only — polar transform runs in XLA when the
        # Mosaic backend of this TPU generation cannot lower atan2 in-kernel.
        r = jnp.sqrt(x[:, 0] * x[:, 0] + x[:, 1] * x[:, 1])
        t = jnp.arctan2(x[:, 1], x[:, 0])
        xt = jnp.stack([r, t], axis=0)                       # [2, N]
        if n_pad != n:
            xt = jnp.pad(xt, ((0, 0), (0, n_pad - n)))       # zeros are safe, sliced off

    # --- weight prep: lane-replicated slabs (built once, resident in VMEM) ---
    w1 = params["w1"]                                        # [H, 2]
    w1x = jnp.broadcast_to(w1[:, 0:1], (h, tm_eff))          # [H, TM]
    w1y = jnp.broadcast_to(w1[:, 1:2], (h, tm_eff))          # [H, TM]
    b1s = jnp.broadcast_to(params["b1"], (h, tm_eff))        # [H, TM]
    w2s = jnp.broadcast_to(params["w2"], (h, tm_eff))        # [H, TM]
    b2 = params["b2"].reshape(1, 1)                          # SMEM scalar

    full = lambda i: (0, 0)                                  # weights stay resident
    kernel = functools.partial(_polarnet_kernel, polar_in_kernel=polar_in_kernel)

    out_t = pl.pallas_call(
        kernel,
        out_shape=jax.ShapeDtypeStruct((1, n_pad), jnp.float32),
        grid=(n_pad // tm_eff,),
        in_specs=[
            pl.BlockSpec((2, tm_eff), lambda i: (0, i)),     # input tile [2, TM]
            pl.BlockSpec((h, tm_eff), full),                 # feed.weight[:,0] slab
            pl.BlockSpec((h, tm_eff), full),                 # feed.weight[:,1] slab
            pl.BlockSpec((h, tm_eff), full),                 # feed.bias slab
            pl.BlockSpec((h, tm_eff), full),                 # hid.weight.T slab
            pl.BlockSpec(memory_space=pltpu.MemorySpace.SMEM),  # hid.bias scalar
        ],
        out_specs=pl.BlockSpec((1, tm_eff), lambda i: (0, i)),
        compiler_params=pltpu.CompilerParams(
            dimension_semantics=("parallel",),               # megacore-friendly
            vmem_limit_bytes=32 * 1024 * 1024,
        ),
        cost_estimate=pl.CostEstimate(
            flops=int(n_pad) * (6 * int(h) + 10),
            transcendentals=int(n_pad) * (int(h) + 3),
            bytes_accessed=4 * (3 * int(n_pad) + 4 * int(h) * int(tm_eff) + 1),
        ),
    )(xt, w1x, w1y, b1s, w2s, b2)

    return out_t[0, :n].reshape(n, 1)


def init_params(key, num_hid):
    """nn.Linear-style uniform init; shapes arranged for the batch-on-lanes kernel."""
    ks = jax.random.split(key, 4)
    lim1 = 2.0 ** -0.5                 # 1/sqrt(fan_in=2)
    lim2 = float(num_hid) ** -0.5      # 1/sqrt(fan_in=num_hid)
    w1 = jax.random.uniform(ks[0], (num_hid, 2), jnp.float32, -lim1, lim1)  # feed.weight
    b1 = jax.random.uniform(ks[1], (num_hid, 1), jnp.float32, -lim1, lim1)  # feed.bias
    w2 = jax.random.uniform(ks[2], (num_hid, 1), jnp.float32, -lim2, lim2)  # hid.weight.T
    b2 = jax.random.uniform(ks[3], (1, 1), jnp.float32, -lim2, lim2)        # hid.bias
    return {"w1": w1, "b1": b1, "w2": w2, "b2": b2}


def polarnet_ref(x, p):
    """Pure-JAX reference matching PolarNet.forward (written without matmuls)."""
    r = jnp.sqrt(x[:, 0] * x[:, 0] + x[:, 1] * x[:, 1])
    t = jnp.arctan2(x[:, 1], x[:, 0])
    h = jnp.tanh(r[:, None] * p["w1"][:, 0][None, :]
                 + t[:, None] * p["w1"][:, 1][None, :]
                 + p["b1"][:, 0][None, :])                                   # [N, H]
    z = jnp.sum(h * p["w2"][:, 0][None, :], axis=1, keepdims=True) + p["b2"][0, 0]
    return jax.nn.sigmoid(z)                                                 # [N, 1]


if __name__ == "__main__":
    key = jax.random.PRNGKey(0)
    kx, kp = jax.random.split(key)

    num_hid = 32
    batch = 200                                  # deliberately not a multiple of 128
    x = jax.random.normal(kx, (batch, 2), jnp.float32)
    params = init_params(kp, num_hid)

    try:
        out = jax.block_until_ready(polarnet_forward(x, params))
    except Exception:
        # TODO(synk): Mosaic on some TPU generations may reject an in-kernel
        # atan2 lowering; compute the polar features in the XLA wrapper instead.
        out = jax.block_until_ready(
            polarnet_forward(x, params, polar_in_kernel=False))

    ref = polarnet_ref(x, params)
    assert out.shape == (batch, 1)
    err = float(jnp.max(jnp.abs(out - ref)))
    assert jnp.allclose(out, ref, atol=1e-4, rtol=1e-4), err

    print("KERNEL_OK")
</pallas_src>

<mosaic_0001>
module attributes {stable_mosaic.version = 11 : i64} {
  func.func @_polarnet_kernel(%arg0: i32, %arg1: memref<2x128xf32, #tpu.memory_space<vmem>>, %arg2: memref<32x128xf32, #tpu.memory_space<vmem>>, %arg3: memref<32x128xf32, #tpu.memory_space<vmem>>, %arg4: memref<32x128xf32, #tpu.memory_space<vmem>>, %arg5: memref<32x128xf32, #tpu.memory_space<vmem>>, %arg6: memref<1x1xf32, #tpu.memory_space<smem>>, %arg7: memref<1x128xf32, #tpu.memory_space<vmem>>) attributes {dimension_semantics = [#tpu.dimension_semantics<parallel>], iteration_bounds = array<i64: 2>, scalar_prefetch = 0 : i64, scratch_operands = 0 : i64, tpu.core_type = #tpu.core_type<tc>, window_params = [{transform_indices = @transform_0, window_bounds = array<i64: 2, 128>}, {pipeline_mode = #tpu.pipeline_mode<synchronous>, transform_indices = @transform_1, window_bounds = array<i64: 32, 128>}, {pipeline_mode = #tpu.pipeline_mode<synchronous>, transform_indices = @transform_2, window_bounds = array<i64: 32, 128>}, {pipeline_mode = #tpu.pipeline_mode<synchronous>, transform_indices = @transform_3, window_bounds = array<i64: 32, 128>}, {pipeline_mode = #tpu.pipeline_mode<synchronous>, transform_indices = @transform_4, window_bounds = array<i64: 32, 128>}, {transform_indices = @transform_5, window_bounds = array<i64: 1, 1>}, {transform_indices = @transform_6, window_bounds = array<i64: 1, 128>}]} {
    %c0 = arith.constant 0 : index
    %c0_0 = arith.constant 0 : index
    %0 = vector.load %arg1[%c0, %c0_0] : memref<2x128xf32, #tpu.memory_space<vmem>>, vector<2x128xf32>
    %1 = vector.extract_strided_slice %0 {offsets = [0, 0], sizes = [1, 128], strides = [1, 1]} : vector<2x128xf32> to vector<1x128xf32>
    %2 = vector.extract_strided_slice %0 {offsets = [1, 0], sizes = [1, 128], strides = [1, 1]} : vector<2x128xf32> to vector<1x128xf32>
    %3 = arith.mulf %1, %1 : vector<1x128xf32>
    %4 = arith.mulf %2, %2 : vector<1x128xf32>
    %5 = arith.addf %3, %4 : vector<1x128xf32>
    %6 = math.sqrt %5 : vector<1x128xf32>
    %7 = math.atan2 %2, %1 : vector<1x128xf32>
    %c0_1 = arith.constant 0 : index
    %c0_2 = arith.constant 0 : index
    %8 = vector.load %arg2[%c0_1, %c0_2] : memref<32x128xf32, #tpu.memory_space<vmem>>, vector<32x128xf32>
    %9 = vector.broadcast %6 : vector<1x128xf32> to vector<32x128xf32>
    %10 = arith.mulf %8, %9 : vector<32x128xf32>
    %c0_3 = arith.constant 0 : index
    %c0_4 = arith.constant 0 : index
    %11 = vector.load %arg3[%c0_3, %c0_4] : memref<32x128xf32, #tpu.memory_space<vmem>>, vector<32x128xf32>
    %12 = vector.broadcast %7 : vector<1x128xf32> to vector<32x128xf32>
    %13 = arith.mulf %11, %12 : vector<32x128xf32>
    %14 = arith.addf %10, %13 : vector<32x128xf32>
    %c0_5 = arith.constant 0 : index
    %c0_6 = arith.constant 0 : index
    %15 = vector.load %arg4[%c0_5, %c0_6] : memref<32x128xf32, #tpu.memory_space<vmem>>, vector<32x128xf32>
    %16 = arith.addf %14, %15 : vector<32x128xf32>
    %17 = math.tanh %16 : vector<32x128xf32>
    %c0_7 = arith.constant 0 : index
    %c0_8 = arith.constant 0 : index
    %18 = vector.load %arg5[%c0_7, %c0_8] : memref<32x128xf32, #tpu.memory_space<vmem>>, vector<32x128xf32>
    %19 = arith.mulf %17, %18 : vector<32x128xf32>
    %cst = arith.constant dense<0.000000e+00> : vector<128xf32>
    %20 = vector.multi_reduction <add>, %19, %cst [0] : vector<32x128xf32> to vector<128xf32>
    %21 = vector.shape_cast %20 : vector<128xf32> to vector<1x128xf32>
    %c0_9 = arith.constant 0 : index
    %c0_10 = arith.constant 0 : index
    %22 = memref.load %arg6[%c0_9, %c0_10] : memref<1x1xf32, #tpu.memory_space<smem>>
    %23 = vector.broadcast %22 : f32 to vector<1x128xf32>
    %24 = arith.addf %21, %23 : vector<1x128xf32>
    %25 = arith.negf %24 : vector<1x128xf32>
    %26 = math.exp %25 : vector<1x128xf32>
    %cst_11 = arith.constant 1.000000e+00 : f32
    %27 = vector.broadcast %cst_11 : f32 to vector<1x128xf32>
    %28 = arith.addf %27, %26 : vector<1x128xf32>
    %29 = arith.divf %27, %28 : vector<1x128xf32>
    %c0_12 = arith.constant 0 : index
    %c0_13 = arith.constant 0 : index
    %30 = vector.load %arg7[%c0_12, %c0_13] : memref<1x128xf32, #tpu.memory_space<vmem>>, vector<1x128xf32>
    tpu.vector_store %arg7[%c0_12, %c0_13], %29 {strides = array<i32>} : memref<1x128xf32, #tpu.memory_space<vmem>>, vector<1x128xf32>,
    return
  }
  func.func @transform_0(%arg0: i32) -> (i32, i32) {
    %c0_i32 = arith.constant 0 : i32
    %c0_i32_0 = arith.constant 0 : i32
    return %c0_i32, %arg0 : i32, i32
  }
  func.func @transform_1(%arg0: i32) -> (i32, i32) {
    %c0_i32 = arith.constant 0 : i32
    %c0_i32_0 = arith.constant 0 : i32
    %c0_i32_1 = arith.constant 0 : i32
    return %c0_i32, %c0_i32_0 : i32, i32
  }
  func.func @transform_2(%arg0: i32) -> (i32, i32) {
    %c0_i32 = arith.constant 0 : i32
    %c0_i32_0 = arith.constant 0 : i32
    %c0_i32_1 = arith.constant 0 : i32
    return %c0_i32, %c0_i32_0 : i32, i32
  }
  func.func @transform_3(%arg0: i32) -> (i32, i32) {
    %c0_i32 = arith.constant 0 : i32
    %c0_i32_0 = arith.constant 0 : i32
    %c0_i32_1 = arith.constant 0 : i32
    return %c0_i32, %c0_i32_0 : i32, i32
  }
  func.func @transform_4(%arg0: i32) -> (i32, i32) {
    %c0_i32 = arith.constant 0 : i32
    %c0_i32_0 = arith.constant 0 : i32
    %c0_i32_1 = arith.constant 0 : i32
    return %c0_i32, %c0_i32_0 : i32, i32
  }
  func.func @transform_5(%arg0: i32) -> (i32, i32) {
    %c0_i32 = arith.constant 0 : i32
    %c0_i32_0 = arith.constant 0 : i32
    %c0_i32_1 = arith.constant 0 : i32
    return %c0_i32, %c0_i32_0 : i32, i32
  }
  func.func @transform_6(%arg0: i32) -> (i32, i32) {
    %c0_i32 = arith.constant 0 : i32
    %c0_i32_0 = arith.constant 0 : i32
    return %c0_i32, %arg0 : i32, i32
  }
}

module attributes {stable_mosaic.version = 11 : i64} {
  func.func @_polarnet_kernel(%arg0: i32, %arg1: memref<2x128xf32, #tpu.memory_space<vmem>>, %arg2: memref<32x128xf32, #tpu.memory_space<vmem>>, %arg3: memref<32x128xf32, #tpu.memory_space<vmem>>, %arg4: memref<32x128xf32, #tpu.memory_space<vmem>>, %arg5: memref<32x128xf32, #tpu.memory_space<vmem>>, %arg6: memref<1x1xf32, #tpu.memory_space<smem>>, %arg7: memref<1x128xf32, #tpu.memory_space<vmem>>) attributes {dimension_semantics = [#tpu.dimension_semantics<parallel>], iteration_bounds = array<i64: 2>, scalar_prefetch = 0 : i64, scratch_operands = 0 : i64, tpu.core_type = #tpu.core_type<tc>, window_params = [{transform_indices = @transform_0, window_bounds = array<i64: 2, 128>}, {pipeline_mode = #tpu.pipeline_mode<synchronous>, transform_indices = @transform_1, window_bounds = array<i64: 32, 128>}, {pipeline_mode = #tpu.pipeline_mode<synchronous>, transform_indices = @transform_2, window_bounds = array<i64: 32, 128>}, {pipeline_mode = #tpu.pipeline_mode<synchronous>, transform_indices = @transform_3, window_bounds = array<i64: 32, 128>}, {pipeline_mode = #tpu.pipeline_mode<synchronous>, transform_indices = @transform_4, window_bounds = array<i64: 32, 128>}, {transform_indices = @transform_5, window_bounds = array<i64: 1, 1>}, {transform_indices = @transform_6, window_bounds = array<i64: 1, 128>}]} {
    %c0 = arith.constant 0 : index
    %c0_0 = arith.constant 0 : index
    %0 = vector.load %arg1[%c0, %c0_0] : memref<2x128xf32, #tpu.memory_space<vmem>>, vector<2x128xf32>
    %1 = vector.extract_strided_slice %0 {offsets = [0, 0], sizes = [1, 128], strides = [1, 1]} : vector<2x128xf32> to vector<1x128xf32>
    %2 = vector.extract_strided_slice %0 {offsets = [1, 0], sizes = [1, 128], strides = [1, 1]} : vector<2x128xf32> to vector<1x128xf32>
    %c0_1 = arith.constant 0 : index
    %c0_2 = arith.constant 0 : index
    %3 = vector.load %arg2[%c0_1, %c0_2] : memref<32x128xf32, #tpu.memory_space<vmem>>, vector<32x128xf32>
    %4 = vector.broadcast %1 : vector<1x128xf32> to vector<32x128xf32>
    %5 = arith.mulf %3, %4 : vector<32x128xf32>
    %c0_3 = arith.constant 0 : index
    %c0_4 = arith.constant 0 : index
    %6 = vector.load %arg3[%c0_3, %c0_4] : memref<32x128xf32, #tpu.memory_space<vmem>>, vector<32x128xf32>
    %7 = vector.broadcast %2 : vector<1x128xf32> to vector<32x128xf32>
    %8 = arith.mulf %6, %7 : vector<32x128xf32>
    %9 = arith.addf %5, %8 : vector<32x128xf32>
    %c0_5 = arith.constant 0 : index
    %c0_6 = arith.constant 0 : index
    %10 = vector.load %arg4[%c0_5, %c0_6] : memref<32x128xf32, #tpu.memory_space<vmem>>, vector<32x128xf32>
    %11 = arith.addf %9, %10 : vector<32x128xf32>
    %12 = math.tanh %11 : vector<32x128xf32>
    %c0_7 = arith.constant 0 : index
    %c0_8 = arith.constant 0 : index
    %13 = vector.load %arg5[%c0_7, %c0_8] : memref<32x128xf32, #tpu.memory_space<vmem>>, vector<32x128xf32>
    %14 = arith.mulf %12, %13 : vector<32x128xf32>
    %cst = arith.constant dense<0.000000e+00> : vector<128xf32>
    %15 = vector.multi_reduction <add>, %14, %cst [0] : vector<32x128xf32> to vector<128xf32>
    %16 = vector.shape_cast %15 : vector<128xf32> to vector<1x128xf32>
    %c0_9 = arith.constant 0 : index
    %c0_10 = arith.constant 0 : index
    %17 = memref.load %arg6[%c0_9, %c0_10] : memref<1x1xf32, #tpu.memory_space<smem>>
    %18 = vector.broadcast %17 : f32 to vector<1x128xf32>
    %19 = arith.addf %16, %18 : vector<1x128xf32>
    %20 = arith.negf %19 : vector<1x128xf32>
    %21 = math.exp %20 : vector<1x128xf32>
    %cst_11 = arith.constant 1.000000e+00 : f32
    %22 = vector.broadcast %cst_11 : f32 to vector<1x128xf32>
    %23 = arith.addf %22, %21 : vector<1x128xf32>
    %24 = arith.divf %22, %23 : vector<1x128xf32>
    %c0_12 = arith.constant 0 : index
    %c0_13 = arith.constant 0 : index
    %25 = vector.load %arg7[%c0_12, %c0_13] : memref<1x128xf32, #tpu.memory_space<vmem>>, vector<1x128xf32>
    tpu.vector_store %arg7[%c0_12, %c0_13], %24 {strides = array<i32>} : memref<1x128xf32, #tpu.memory_space<vmem>>, vector<1x128xf32>,
    return
  }
  func.func @transform_0(%arg0: i32) -> (i32, i32) {
    %c0_i32 = arith.constant 0 : i32
    %c0_i32_0 = arith.constant 0 : i32
    return %c0_i32, %arg0 : i32, i32
  }
  func.func @transform_1(%arg0: i32) -> (i32, i32) {
    %c0_i32 = arith.constant 0 : i32
    %c0_i32_0 = arith.constant 0 : i32
    %c0_i32_1 = arith.constant 0 : i32
    return %c0_i32, %c0_i32_0 : i32, i32
  }
  func.func @transform_2(%arg0: i32) -> (i32, i32) {
    %c0_i32 = arith.constant 0 : i32
    %c0_i32_0 = arith.constant 0 : i32
    %c0_i32_1 = arith.constant 0 : i32
    return %c0_i32, %c0_i32_0 : i32, i32
  }
  func.func @transform_3(%arg0: i32) -> (i32, i32) {
    %c0_i32 = arith.constant 0 : i32
    %c0_i32_0 = arith.constant 0 : i32
    %c0_i32_1 = arith.constant 0 : i32
    return %c0_i32, %c0_i32_0 : i32, i32
  }
  func.func @transform_4(%arg0: i32) -> (i32, i32) {
    %c0_i32 = arith.constant 0 : i32
    %c0_i32_0 = arith.constant 0 : i32
    %c0_i32_1 = arith.constant 0 : i32
    return %c0_i32, %c0_i32_0 : i32, i32
  }
  func.func @transform_5(%arg0: i32) -> (i32, i32) {
    %c0_i32 = arith.constant 0 : i32
    %c0_i32_0 = arith.constant 0 : i32
    %c0_i32_1 = arith.constant 0 : i32
    return %c0_i32, %c0_i32_0 : i32, i32
  }
  func.func @transform_6(%arg0: i32) -> (i32, i32) {
    %c0_i32 = arith.constant 0 : i32
    %c0_i32_0 = arith.constant 0 : i32
    return %c0_i32, %arg0 : i32, i32
  }
}

</mosaic_0001>

<llo_original>
// kernel: tpu_custom_call.1
$region0: #{tpu_custom_call.1}
  #allocation0 [shape = 'u32[]', space=smem, size = 0x4, offset = 0x4, fixed_abs, tag = 'smem constant byte address 0x4 - core index']
  #allocation1 [shape = 'u32[144,128]{1,0:T(1,128)}', space=vmem, size = 0x12000, scoped, tag = 'internal scratch']
  #allocation2 [shape = 'f32[1,1]{1,0:T(1,128)S(6)}', space=smem, size = 0x200, scoped, tag = 'scoped memory for tpu_custom_call.1']
  %s0 = inlined_call_operand.hbm [shape: f32[2,256], index: 0, kind: input, shape index: {}]
  %s1 = inlined_call_operand.hbm [shape: f32[32,128], index: 1, kind: input, shape index: {}]
  %s2 = inlined_call_operand.hbm [shape: f32[32,128], index: 2, kind: input, shape index: {}]
  %s3 = inlined_call_operand.hbm [shape: f32[32,128], index: 3, kind: input, shape index: {}]
  %s4 = inlined_call_operand.hbm [shape: f32[32,128], index: 4, kind: input, shape index: {}]
  %s5 = inlined_call_operand.<no memory space> [shape: f32[1,1], index: 5, kind: input, shape index: {}]
  %s6 = inlined_call_operand.hbm [shape: f32[1,256], index: 6, kind: output, shape index: {}]
  %s7 = sld [smem:[#allocation0]]
  $region77: #{tpu_custom_call.1} parent=0
    _
  %s9 = ssub.s32 1, %s7
  %s10 = scalar_select 0, %s9, %s7
  %11 = sst [smem:[#allocation2]] %s5
  $region1: #{tpu_custom_call.1} parent=0
    #allocation3 [shape = 'u8[2048]{0}', space=vmem, size = 0x800, scoped, tag = 'input window, operand 0']
    #allocation4 [shape = 's32[2]{0}', space=sflag, size = 0x8, scoped, tag = 'scoped memory for tpu_custom_call.1']
    #allocation5 [shape = 's32[2]{0}', space=sflag, size = 0x8, scoped, tag = 'scoped memory for tpu_custom_call.1']
    #allocation6 [shape = 'u8[16384]{0}', space=vmem, size = 0x4000, scoped, tag = 'input window, operand 1, single buffered']
    #allocation7 [shape = 's32[1]{0}', space=sflag, size = 0x4, scoped, tag = 'scoped memory for tpu_custom_call.1']
    #allocation8 [shape = 'u8[16384]{0}', space=vmem, size = 0x4000, scoped, tag = 'input window, operand 2, single buffered']
    #allocation9 [shape = 'u8[16384]{0}', space=vmem, size = 0x4000, scoped, tag = 'input window, operand 3, single buffered']
    #allocation10 [shape = 's32[1]{0}', space=sflag, size = 0x4, scoped, tag = 'scoped memory for tpu_custom_call.1']
    #allocation11 [shape = 'u8[16384]{0}', space=vmem, size = 0x4000, scoped, tag = 'input window, operand 4, single buffered']
    #allocation12 [shape = 'u8[1024]{0}', space=vmem, size = 0x400, scoped, tag = 'output window, operand 0']
    %12 = vsyncpa [#allocation4], 0
    %s13 = scalar_lea.sflag [#allocation4], 1
    %14 = vsyncpa %s13, 0
    %15 = vsyncpa [#allocation7], 0
    %16 = vsyncpa [#allocation10], 0
    %17 = vsyncpa [#allocation5], 0
    %s18 = scalar_lea.sflag [#allocation5], 1
    %19 = vsyncpa %s18, 0
    loop: start=0, step=1, limit=4
    $region2: #{tpu_custom_call.1} parent=1 // loop_pre_header
      _
    $region3: #{tpu_custom_call.1} parent=1 // loop_header
      %s21 = sphi 0, %s25
      %p22 = scmp.ge.s32.totalorder %s21, 4
      %s31 = sphi 0, %s33
      %s34 = sphi 0, %s31
      %s35 = sphi 0, %s34
      %s51 = sphi 0, %s35
      %s55 = sphi 0, %s55
      %s57 = sphi 0, %s55
      %s58 = sphi 0, %s57
      %s72 = sphi 0, %s58
      %s76 = sphi 0, %s76
      %s78 = sphi 0, %s76
      %s79 = sphi 0, %s78
      %s93 = sphi 0, %s79
      %s97 = sphi 0, %s97
      %s99 = sphi 0, %s97
      %s100 = sphi 0, %s99
      %s114 = sphi 0, %s100
      %s118 = sphi 0, %s118
      %s120 = sphi 0, %s118
      %s121 = sphi 0, %s120
      %s135 = sphi 0, %s121
      %s139 = sphi 0, %s139
      %s141 = sphi 0, %s139
      %s142 = sphi 0, %s141
      %s156 = sphi 0, %s142
      %s162 = sphi 0, %s164
      %s165 = sphi 0, %s162
      %s166 = sphi 0, %s165
      %s182 = sphi 0, %s166
    $region4: #{tpu_custom_call.1} parent=1 // loop_header_branch
      %24 = sbr.rel (%p22) target = $region8
    $region5: #{tpu_custom_call.1} parent=1 // loop_body
      %s26 = ssub.s32 %s21, 1
      %s27 = ssub.s32 %s21, 2
      %s28 = sadd.s32 %s21, 1
      %s29 = ssub.s32 %s21, %s28
      %p30 = scmp.eq.s32.totalorder %s29, 0
      %s32 = sadd.s32 %s31, 1
      %s33 = scalar_select %p30, %s31, %s32
      %p36 = pneg %p30
      %p37 = scmp.eq.s32.totalorder %s21, 1
      %p38 = por %p36, %p37
      %p39 = scmp.ne.s32.totalorder %s31, %s34
      %p40 = scmp.eq.s32.totalorder %s21, 0
      %p41 = por %p39, %p40
      %p42 = scmp.ne.s32.totalorder %s31, %s34
      %p43 = scmp.eq.s32.totalorder %s26, 1
      %p44 = por %p42, %p43
      %p45 = scmp.ne.s32.totalorder %s34, %s35
      %p46 = scmp.eq.s32.totalorder %s26, 0
      %p47 = por %p45, %p46
      %p48 = scmp.ne.s32.totalorder %s34, %s35
      %p49 = scmp.eq.s32.totalorder %s27, 1
      %p50 = por %p48, %p49
      %p52 = scmp.ne.s32.totalorder %s35, %s51
      %p53 = scmp.eq.s32.totalorder %s27, 0
      %p54 = por %p52, %p53
      %s56 = sadd.s32 %s55, 1
      %p59 = scmp.eq.s32.totalorder %s21, 1
      %p60 = scmp.ne.s32.totalorder %s55, %s57
      %p61 = scmp.eq.s32.totalorder %s21, 0
      %p62 = por %p60, %p61
      %p63 = scmp.ne.s32.totalorder %s55, %s57
      %p64 = scmp.eq.s32.totalorder %s26, 1
      %p65 = por %p63, %p64
      %p66 = scmp.ne.s32.totalorder %s57, %s58
      %p67 = scmp.eq.s32.totalorder %s26, 0
      %p68 = por %p66, %p67
      %p69 = scmp.ne.s32.totalorder %s57, %s58
      %p70 = scmp.eq.s32.totalorder %s27, 1
      %p71 = por %p69, %p70
      %p73 = scmp.ne.s32.totalorder %s58, %s72
      %p74 = scmp.eq.s32.totalorder %s27, 0
      %p75 = por %p73, %p74
      %s77 = sadd.s32 %s76, 1
      %p80 = scmp.eq.s32.totalorder %s21, 1
      %p81 = scmp.ne.s32.totalorder %s76, %s78
      %p82 = scmp.eq.s32.totalorder %s21, 0
      %p83 = por %p81, %p82
      %p84 = scmp.ne.s32.totalorder %s76, %s78
      %p85 = scmp.eq.s32.totalorder %s26, 1
      %p86 = por %p84, %p85
      %p87 = scmp.ne.s32.totalorder %s78, %s79
      %p88 = scmp.eq.s32.totalorder %s26, 0
      %p89 = por %p87, %p88
      %p90 = scmp.ne.s32.totalorder %s78, %s79
      %p91 = scmp.eq.s32.totalorder %s27, 1
      %p92 = por %p90, %p91
      %p94 = scmp.ne.s32.totalorder %s79, %s93
      %p95 = scmp.eq.s32.totalorder %s27, 0
      %p96 = por %p94, %p95
      %s98 = sadd.s32 %s97, 1
      %p101 = scmp.eq.s32.totalorder %s21, 1
      %p102 = scmp.ne.s32.totalorder %s97, %s99
      %p103 = scmp.eq.s32.totalorder %s21, 0
      %p104 = por %p102, %p103
      %p105 = scmp.ne.s32.totalorder %s97, %s99
      %p106 = scmp.eq.s32.totalorder %s26, 1
      %p107 = por %p105, %p106
      %p108 = scmp.ne.s32.totalorder %s99, %s100
      %p109 = scmp.eq.s32.totalorder %s26, 0
      %p110 = por %p108, %p109
      %p111 = scmp.ne.s32.totalorder %s99, %s100
      %p112 = scmp.eq.s32.totalorder %s27, 1
      %p113 = por %p111, %p112
      %p115 = scmp.ne.s32.totalorder %s100, %s114
      %p116 = scmp.eq.s32.totalorder %s27, 0
      %p117 = por %p115, %p116
      %s119 = sadd.s32 %s118, 1
      %p122 = scmp.eq.s32.totalorder %s21, 1
      %p123 = scmp.ne.s32.totalorder %s118, %s120
      %p124 = scmp.eq.s32.totalorder %s21, 0
      %p125 = por %p123, %p124
      %p126 = scmp.ne.s32.totalorder %s118, %s120
      %p127 = scmp.eq.s32.totalorder %s26, 1
      %p128 = por %p126, %p127
      %p129 = scmp.ne.s32.totalorder %s120, %s121
      %p130 = scmp.eq.s32.totalorder %s26, 0
      %p131 = por %p129, %p130
      %p132 = scmp.ne.s32.totalorder %s120, %s121
      %p133 = scmp.eq.s32.totalorder %s27, 1
      %p134 = por %p132, %p133
      %p136 = scmp.ne.s32.totalorder %s121, %s135
      %p137 = scmp.eq.s32.totalorder %s27, 0
      %p138 = por %p136, %p137
      %s140 = sadd.s32 %s139, 1
      %p143 = scmp.eq.s32.totalorder %s21, 1
      %p144 = scmp.ne.s32.totalorder %s139, %s141
      %p145 = scmp.eq.s32.totalorder %s21, 0
      %p146 = por %p144, %p145
      %p147 = scmp.ne.s32.totalorder %s139, %s141
      %p148 = scmp.eq.s32.totalorder %s26, 1
      %p149 = por %p147, %p148
      %p150 = scmp.ne.s32.totalorder %s141, %s142
      %p151 = scmp.eq.s32.totalorder %s26, 0
      %p152 = por %p150, %p151
      %p153 = scmp.ne.s32.totalorder %s141, %s142
      %p154 = scmp.eq.s32.totalorder %s27, 1
      %p155 = por %p153, %p154
      %p157 = scmp.ne.s32.totalorder %s142, %s156
      %p158 = scmp.eq.s32.totalorder %s27, 0
      %p159 = por %p157, %p158
      %s160 = ssub.s32 %s21, %s28
      %p161 = scmp.eq.s32.totalorder %s160, 0
      %s163 = sadd.s32 %s162, 1
      %s164 = scalar_select %p161, %s162, %s163
      %p167 = pneg %p161
      %p168 = scmp.eq.s32.totalorder %s21, 1
      %p169 = por %p167, %p168
      %p170 = scmp.ne.s32.totalorder %s162, %s165
      %p171 = scmp.eq.s32.totalorder %s21, 0
      %p172 = por %p170, %p171
      %p173 = scmp.ne.s32.totalorder %s162, %s165
      %p174 = scmp.eq.s32.totalorder %s26, 1
      %p175 = por %p173, %p174
      %p176 = scmp.ne.s32.totalorder %s165, %s166
      %p177 = scmp.eq.s32.totalorder %s26, 0
      %p178 = por %p176, %p177
      %p179 = scmp.ne.s32.totalorder %s165, %s166
      %p180 = scmp.eq.s32.totalorder %s27, 1
      %p181 = por %p179, %p180
      %p183 = scmp.ne.s32.totalorder %s166, %s182
      %p184 = scmp.eq.s32.totalorder %s27, 0
      %p185 = por %p183, %p184
      %p186 = scmp.le.s32.totalorder 1, %s21
      %p187 = scmp.lt.s32.totalorder %s21, 3
      %p188 = pnand %p186, %p187
      %p189 = pneg %p188
      // Predicated region
      $region9: #{tpu_custom_call.1} parent=5 // pred_check
        _
      $region10: #{tpu_custom_call.1} parent=5 // pred_check_branch
        %191 = sbr.rel (%p188) target = $region12
      $region11: #{tpu_custom_call.1} parent=5 // pred_region
        %s192 = ssub.s32 %s21, 1
        // Predicated region
        $region13: #{tpu_custom_call.1} parent=11 // pred_check
          %p193 = pneg %p68
        $region14: #{tpu_custom_call.1} parent=11 // pred_check_branch
          %195 = sbr.rel (%p193) target = $region16
        $region15: #{tpu_custom_call.1} parent=11 // pred_region
          %s197 = ssub.s32 512, 512
          %198 = vsyncadd [#allocation7], %s197
          %s199 = sshll.u32 [#allocation6], 4
          %s200 = int_to_ptr.vmem [resolvable:$true] %s199
          %205 = dma.hbm_to_vmem [thread:$0]  %s1, 512, %s200, [#allocation7], 128, 128, 8
        $region16: #{tpu_custom_call.1} parent=11 // pred_fallthru
          _
        // Predicated region
        $region17: #{tpu_custom_call.1} parent=11 // pred_check
          %p206 = pneg %p89
        $region18: #{tpu_custom_call.1} parent=11 // pred_check_branch
          %208 = sbr.rel (%p206) target = $region20
        $region19: #{tpu_custom_call.1} parent=11 // pred_region
          %s210 = ssub.s32 512, 512
          %211 = vsyncadd [#allocation7], %s210
          %s212 = sshll.u32 [#allocation8], 4
          %s213 = int_to_ptr.vmem [resolvable:$true] %s212
          %218 = dma.hbm_to_vmem [thread:$0]  %s2, 512, %s213, [#allocation7], 128, 128, 8
        $region20: #{tpu_custom_call.1} parent=11 // pred_fallthru
          _
        // Predicated region
        $region21: #{tpu_custom_call.1} parent=11 // pred_check
          %p219 = pneg %p110
        $region22: #{tpu_custom_call.1} parent=11 // pred_check_branch
          %221 = sbr.rel (%p219) target = $region24
        $region23: #{tpu_custom_call.1} parent=11 // pred_region
          %s223 = ssub.s32 512, 512
          %224 = vsyncadd [#allocation10], %s223
          %s225 = sshll.u32 [#allocation9], 4
          %s226 = int_to_ptr.vmem [resolvable:$true] %s225
          %231 = dma.hbm_to_vmem [thread:$0]  %s3, 512, %s226, [#allocation10], 128, 128, 8
        $region24: #{tpu_custom_call.1} parent=11 // pred_fallthru
          _
        // Predicated region
        $region25: #{tpu_custom_call.1} parent=11 // pred_check
          %p232 = pneg %p131
        $region26: #{tpu_custom_call.1} parent=11 // pred_check_branch
          %234 = sbr.rel (%p232) target = $region28
        $region27: #{tpu_custom_call.1} parent=11 // pred_region
          %s236 = ssub.s32 512, 512
          %237 = vsyncadd [#allocation10], %s236
          %s238 = sshll.u32 [#allocation11], 4
          %s239 = int_to_ptr.vmem [resolvable:$true] %s238
          %244 = dma.hbm_to_vmem [thread:$0]  %s4, 512, %s239, [#allocation10], 128, 128, 8
        $region28: #{tpu_custom_call.1} parent=11 // pred_fallthru
          _
        // Predicated region
        $region29: #{tpu_custom_call.1} parent=11 // pred_check
          %p245 = pneg %p152
        $region30: #{tpu_custom_call.1} parent=11 // pred_check_branch
          %247 = sbr.rel (%p245) target = $region32
        $region31: #{tpu_custom_call.1} parent=11 // pred_region
          _
        $region32: #{tpu_custom_call.1} parent=11 // pred_fallthru
          _
      $region12: #{tpu_custom_call.1} parent=5 // pred_fallthru
        _
      %p248 = scmp.lt.s32.totalorder %s21, 2
      // Predicated region
      $region33: #{tpu_custom_call.1} parent=5 // pred_check
        %p249 = pneg %p248
      $region34: #{tpu_custom_call.1} parent=5 // pred_check_branch
        %251 = sbr.rel (%p249) target = $region36
      $region35: #{tpu_custom_call.1} parent=5 // pred_region
        // Predicated region
        $region37: #{tpu_custom_call.1} parent=35 // pred_check
          %p252 = pneg %p41
        $region38: #{tpu_custom_call.1} parent=35 // pred_check_branch
          %254 = sbr.rel (%p252) target = $region40
        $region39: #{tpu_custom_call.1} parent=35 // pred_region
          %s255 = sand.u32 %s31, 1
          %s256 = scalar_lea.sflag [#allocation4], %s255
          %s257 = sand.u32 %s31, 1
          %s258 = smul.addr %s257, 2
          %s259 = scalar_lea.vmem [#allocation3], %s258
          %s261 = ssub.s32 32, 32
          %262 = vsyncadd %s256, %s261
          %s263 = smul.addr %s21, 32
          %s264 = scalar_lea.hbm %s0, %s263
          %s266 = sshll.u32 %s259, 4
          %s267 = int_to_ptr.vmem [resolvable:$true] %s266
          %269 = dma.hbm_to_vmem [thread:$0]  %s264, 32, %s267, %s256
        $region40: #{tpu_custom_call.1} parent=35 // pred_fallthru
          _
      $region36: #{tpu_custom_call.1} parent=5 // pred_fallthru
        _
      %p270 = scmp.le.s32.totalorder 1, %s21
      %p271 = scmp.lt.s32.totalorder %s21, 3
      %p272 = pnand %p270, %p271
      %p273 = pneg %p272
      // Predicated region
      $region41: #{tpu_custom_call.1} parent=5 // pred_check
        _
      $region42: #{tpu_custom_call.1} parent=5 // pred_check_branch
        %275 = sbr.rel (%p272) target = $region44
      $region43: #{tpu_custom_call.1} parent=5 // pred_region
        %s276 = ssub.s32 %s21, 1
        %s277 = sand.u32 %s34, 1
        %s278 = scalar_lea.sflag [#allocation4], %s277
        %s279 = sand.u32 %s34, 1
        %s280 = smul.addr %s279, 2
        %s281 = scalar_lea.vmem [#allocation3], %s280
        // Predicated region
        $region45: #{tpu_custom_call.1} parent=43 // pred_check
          %p282 = pneg %p47
        $region46: #{tpu_custom_call.1} parent=43 // pred_check_branch
          %284 = sbr.rel (%p282) target = $region48
        $region47: #{tpu_custom_call.1} parent=43 // pred_region
          %285 = dma.done %s278, 32
        $region48: #{tpu_custom_call.1} parent=43 // pred_fallthru
          _
        // Predicated region
        $region49: #{tpu_custom_call.1} parent=43 // pred_check
          %p286 = pneg %p68
        $region50: #{tpu_custom_call.1} parent=43 // pred_check_branch
          %288 = sbr.rel (%p286) target = $region52
        $region51: #{tpu_custom_call.1} parent=43 // pred_region
          %289 = dma.done [#allocation7], 512
        $region52: #{tpu_custom_call.1} parent=43 // pred_fallthru
          _
        // Predicated region
        $region53: #{tpu_custom_call.1} parent=43 // pred_check
          %p290 = pneg %p89
        $region54: #{tpu_custom_call.1} parent=43 // pred_check_branch
          %292 = sbr.rel (%p290) target = $region56
        $region55: #{tpu_custom_call.1} parent=43 // pred_region
          %293 = dma.done [#allocation7], 512
        $region56: #{tpu_custom_call.1} parent=43 // pred_fallthru
          _
        // Predicated region
        $region57: #{tpu_custom_call.1} parent=43 // pred_check
          %p294 = pneg %p110
        $region58: #{tpu_custom_call.1} parent=43 // pred_check_branch
          %296 = sbr.rel (%p294) target = $region60
        $region59: #{tpu_custom_call.1} parent=43 // pred_region
          %297 = dma.done [#allocation10], 512
        $region60: #{tpu_custom_call.1} parent=43 // pred_fallthru
          _
        // Predicated region
        $region61: #{tpu_custom_call.1} parent=43 // pred_check
          %p298 = pneg %p131
        $region62: #{tpu_custom_call.1} parent=43 // pred_check_branch
          %300 = sbr.rel (%p298) target = $region64
        $region63: #{tpu_custom_call.1} parent=43 // pred_region
          %301 = dma.done [#allocation10], 512
        $region64: #{tpu_custom_call.1} parent=43 // pred_fallthru
          _
        %s302 = sand.u32 %s34, 1
        %s303 = scalar_lea.sflag [#allocation4], %s302
        %s304 = sand.u32 %s34, 1
        %s305 = smul.addr %s304, 2
        %s306 = scalar_lea.vmem [#allocation3], %s305
        %p307 = pneg %p47
        %p308 = pneg %p44
        %p309 = pneg %p68
        %p310 = pneg %p65
        %p311 = pneg %p89
        %p312 = pneg %p86
        %p313 = pneg %p110
        %p314 = pneg %p107
        %p315 = pneg %p131
        %p316 = pneg %p128
        %p317 = pneg %p152
        %p318 = pneg %p149
        %p319 = pneg %p178
        %p320 = pneg %p175
        %s321 = sand.u32 %s165, 1
        %s322 = scalar_lea.sflag [#allocation5], %s321
        %s323 = sand.u32 %s165, 1
        %s324 = scalar_lea.vmem [#allocation12], %s323
        %v325 = vld [vmem:[%s281] sm:$0x3]
        %v326 = vmul.f32 %v325, %v325
        %v328 = vrot.slane %v326, 1
        %v330 = vadd.f32 %v326, %v328
        %v331 = vrsqrt.pop %v330
        %v332 = vmul.f32 %v330, %v331
        %vm333 = vcmp.eq.f32.partialorder %v330, inf
        %v334 = vsel %vm333, %v330, %v332
        %vm335 = vcmp.eq.f32.partialorder %v330, 0.0
        %v336 = vand.u32 %v330, 2147483648
        %v337 = vsel %vm335, %v336, %v334
        %v339 = vrot.slane %v325, 7
        %v341 = vand.u32 2147483647, %v339
        %v342 = vand.u32 2147483647, %v325
        %v343 = vmin.f32 %v341, %v342
        %v344 = vmax.f32 %v341, %v342
        %v345 = vrcp.pop %v344
        %v346 = vmul.f32 %v343, %v345
        %v347 = vmul.f32 %v346, %v346
        %v348 = vmul.f32 0.002785687, %v347
        %v349 = vadd.f32 %v348, -0.015866
        %v350 = vmul.f32 %v349, %v347
        %v351 = vadd.f32 %v350, 0.04247222
        %v352 = vmul.f32 %v351, %v347
        %v353 = vadd.f32 %v352, -0.074975304
        %v354 = vmul.f32 %v353, %v347
        %v355 = vadd.f32 %v354, 0.1064488
        %v356 = vmul.f32 %v355, %v347
        %v357 = vadd.f32 %v356, -0.14207031
        %v358 = vmul.f32 %v357, %v347
        %v359 = vadd.f32 %v358, 0.19993454
        %v360 = vmul.f32 %v359, %v347
        %v361 = vadd.f32 %v360, -0.33333147
        %v362 = vmul.f32 %v361, %v347
        %v363 = vmul.f32 %v362, %v346
        %v364 = vadd.f32 %v363, %v346
        %vm365 = vcmp.gt.f32.partialorder %v342, %v341
        %v366 = vsub.f32 1.5707964, %v364
        %v367 = vsel %vm365, %v366, %v364
        %vm368 = vcmp.lt.f32.partialorder %v339, 0.0
        %v369 = vsub.f32 3.1415927, %v367
        %v370 = vsel %vm368, %v369, %v367
        %vm371 = vcmp.lt.s32.totalorder %v339, 0
        %v372 = vsel %vm371, 3.1415927, 0.0
        %vm373 = vcmp.eq.f32.partialorder %v325, 0.0
        %v374 = vsel %vm373, %v372, %v370
        %vm375 = vcmp.ne.f32.partialorder %v339, %v339
        %vm376 = vcmp.ne.f32.partialorder %v325, %v325
        %vm377 = vmor %vm375, %vm376
        %v378 = vsel %vm377, nan, %v374
        %vm379 = vcmp.lt.f32.partialorder %v339, 0.0
        %v380 = vsel %vm379, 2.3561945, 0.7853982
        %vm381 = vcmp.eq.s32.totalorder %v341, inf
        %vm382 = vcmp.eq.s32.totalorder %v342, inf
        %vm383 = vmand %vm381, %vm382
        %v384 = vsel %vm383, %v380, %v378
        %v385 = vand.u32 2147483647, %v384
        %v386 = vand.u32 %v325, 2147483648
        %v387 = vor.u32 %v385, %v386
        %v388 = vld [vmem:[#allocation6] sm:$0xff]
        %v389 = vld [vmem:[#allocation6 + $0x8] sm:$0xff]
        %v390 = vld [vmem:[#allocation6 + $0x10] sm:$0xff]
        %v391 = vld [vmem:[#allocation6 + $0x18] sm:$0xff]
        %v392 = vlaneseq
        %v393 = vshrl.u32 %v392, 7
        %v394 = vsub.s32 0, %v393
        %v395 = vrot.slane %v337, %v394
        %v396 = vmul.f32 %v388, %v395
        %v397 = vmul.f32 %v389, %v395
        %v398 = vmul.f32 %v390, %v395
        %v399 = vmul.f32 %v391, %v395
        %v400 = vld [vmem:[#allocation8] sm:$0xff]
        %v401 = vld [vmem:[#allocation8 + $0x8] sm:$0xff]
        %v402 = vld [vmem:[#allocation8 + $0x10] sm:$0xff]
        %v403 = vld [vmem:[#allocation8 + $0x18] sm:$0xff]
        %v404 = vlaneseq
        %v405 = vshrl.u32 %v404, 7
        %v406 = vsub.s32 1, %v405
        %v407 = vrot.slane %v387, %v406
        %v408 = vmul.f32 %v400, %v407
        %v409 = vmul.f32 %v401, %v407
        %v410 = vmul.f32 %v402, %v407
        %v411 = vmul.f32 %v403, %v407
        %v412 = vadd.f32 %v396, %v408
        %v413 = vadd.f32 %v397, %v409
        %v414 = vadd.f32 %v398, %v410
        %v415 = vadd.f32 %v399, %v411
        %v416 = vld [vmem:[#allocation9] sm:$0xff]
        %v417 = vld [vmem:[#allocation9 + $0x8] sm:$0xff]
        %v418 = vld [vmem:[#allocation9 + $0x10] sm:$0xff]
        %v419 = vld [vmem:[#allocation9 + $0x18] sm:$0xff]
        %v420 = vadd.f32 %v412, %v416
        %v421 = vadd.f32 %v413, %v417
        %v422 = vadd.f32 %v414, %v418
        %v423 = vadd.f32 %v415, %v419
        %v424 = vtanh.pop %v420
        %v425 = vtanh.pop %v421
        %v426 = vtanh.pop %v422
        %v427 = vtanh.pop %v423
        %v428 = vld [vmem:[#allocation11] sm:$0xff]
        %v429 = vld [vmem:[#allocation11 + $0x8] sm:$0xff]
        %v430 = vld [vmem:[#allocation11 + $0x10] sm:$0xff]
        %v431 = vld [vmem:[#allocation11 + $0x18] sm:$0xff]
        %v432 = vmul.f32 %v424, %v428
        %v433 = vmul.f32 %v425, %v429
        %v434 = vmul.f32 %v426, %v430
        %v435 = vmul.f32 %v427, %v431
        %v436 = vadd.f32 %v432, %v433
        %v437 = vadd.f32 %v436, %v434
        %v438 = vadd.f32 %v437, %v435
        %v439 = vrot.slane %v438, 4
        %v440 = vadd.f32 %v438, %v439
        %v441 = vrot.slane %v440, 2
        %v442 = vadd.f32 %v440, %v441
        %v443 = vrot.slane %v442, 1
        %v444 = vadd.f32 %v442, %v443
        %s445 = sld [smem:[#allocation2]]
        %v446 = vstv %s445
        %v447 = vadd.f32 %v444, %v446
        %v448 = vxor.u32 %v447, 2147483648
        %v449 = vmul.f32 %v448, 1.442695
        %v450 = vpow.pop %v449
        %v451 = vadd.f32 %v450, 1.0
        %v452 = vrcp.pop %v451
        %v453 = vmul.f32 1.0, %v452
        %454 = vst [vmem:[%s324] sm:$0x1] %v453
        %s455 = sand.u32 %s165, 1
        %s456 = scalar_lea.sflag [#allocation5], %s455
        %s457 = sand.u32 %s165, 1
        %s458 = scalar_lea.vmem [#allocation12], %s457
        // Predicated region
        $region65: #{tpu_custom_call.1} parent=43 // pred_check
          %p459 = pneg %p175
        $region66: #{tpu_custom_call.1} parent=43 // pred_check_branch
          %461 = sbr.rel (%p459) target = $region68
        $region67: #{tpu_custom_call.1} parent=43 // pred_region
          %s463 = ssub.s32 16, 16
          %464 = vsyncadd %s456, %s463
          %s465 = smul.addr %s26, 16
          %s466 = scalar_lea.hbm %s6, %s465
          %s468 = sshll.u32 %s458, 4
          %s469 = int_to_ptr.vmem [resolvable:$true] %s468
          %471 = dma.vmem_to_hbm [thread:$0]  %s469, 16, %s466, %s456
        $region68: #{tpu_custom_call.1} parent=43 // pred_fallthru
          _
      $region44: #{tpu_custom_call.1} parent=5 // pred_fallthru
        _
      %p472 = scmp.le.s32.totalorder 2, %s21
      // Predicated region
      $region69: #{tpu_custom_call.1} parent=5 // pred_check
        %p473 = pneg %p472
      $region70: #{tpu_custom_call.1} parent=5 // pred_check_branch
        %475 = sbr.rel (%p473) target = $region72
      $region71: #{tpu_custom_call.1} parent=5 // pred_region
        %s476 = ssub.s32 %s21, 2
        // Predicated region
        $region73: #{tpu_custom_call.1} parent=71 // pred_check
          %p477 = pneg %p181
        $region74: #{tpu_custom_call.1} parent=71 // pred_check_branch
          %479 = sbr.rel (%p477) target = $region76
        $region75: #{tpu_custom_call.1} parent=71 // pred_region
          %s480 = sand.u32 %s166, 1
          %s481 = scalar_lea.sflag [#allocation5], %s480
          %s482 = sand.u32 %s166, 1
          %s483 = scalar_lea.vmem [#allocation12], %s482
          %484 = dma.done %s481, 16
        $region76: #{tpu_custom_call.1} parent=71 // pred_fallthru
          _
      $region72: #{tpu_custom_call.1} parent=5 // pred_fallthru
        _
    $region6: #{tpu_custom_call.1} parent=1 // loop_footer
      %s25 = sadd.s32 1, %s21
    $region7: #{tpu_custom_call.1} parent=1 // loop_footer_branch
      %20 = sbr.rel target = $region3
    $region8: #{tpu_custom_call.1} parent=1 // loop_exit
      _
    %485 = vsyncpa [#allocation4], 1
    %s486 = scalar_lea.sflag [#allocation4], 1
    %487 = vsyncpa %s486, 1
    %488 = vsyncpa [#allocation7], 1
    %489 = vsyncpa [#allocation10], 1
    %490 = vsyncpa [#allocation5], 1
    %s491 = scalar_lea.sflag [#allocation5], 1
    %492 = vsyncpa %s491, 1

// kernel: tpu_custom_call.1
$region0: #{tpu_custom_call.1}
  #allocation0 [shape = 'u32[]', space=smem, size = 0x4, offset = 0x4, fixed_abs, tag = 'smem constant byte address 0x4 - core index']
  #allocation1 [shape = 'u32[144,128]{1,0:T(1,128)}', space=vmem, size = 0x12000, scoped, tag = 'internal scratch']
  #allocation2 [shape = 'f32[1,1]{1,0:T(1,128)S(6)}', space=smem, size = 0x200, scoped, tag = 'scoped memory for tpu_custom_call.1']
  %s0 = inlined_call_operand.hbm [shape: f32[2,256], index: 0, kind: input, shape index: {}]
  %s1 = inlined_call_operand.hbm [shape: f32[32,128], index: 1, kind: input, shape index: {}]
  %s2 = inlined_call_operand.hbm [shape: f32[32,128], index: 2, kind: input, shape index: {}]
  %s3 = inlined_call_operand.hbm [shape: f32[32,128], index: 3, kind: input, shape index: {}]
  %s4 = inlined_call_operand.hbm [shape: f32[32,128], index: 4, kind: input, shape index: {}]
  %s5 = inlined_call_operand.<no memory space> [shape: f32[1,1], index: 5, kind: input, shape index: {}]
  %s6 = inlined_call_operand.hbm [shape: f32[1,256], index: 6, kind: output, shape index: {}]
  %s7 = sld [smem:[#allocation0]]
  $region77: #{tpu_custom_call.1} parent=0
    _
  %s9 = ssub.s32 1, %s7
  %s10 = scalar_select 0, %s9, %s7
  %11 = sst [smem:[#allocation2]] %s5
  $region1: #{tpu_custom_call.1} parent=0
    #allocation3 [shape = 'u8[2048]{0}', space=vmem, size = 0x800, scoped, tag = 'input window, operand 0']
    #allocation4 [shape = 's32[2]{0}', space=sflag, size = 0x8, scoped, tag = 'scoped memory for tpu_custom_call.1']
    #allocation5 [shape = 's32[2]{0}', space=sflag, size = 0x8, scoped, tag = 'scoped memory for tpu_custom_call.1']
    #allocation6 [shape = 'u8[16384]{0}', space=vmem, size = 0x4000, scoped, tag = 'input window, operand 1, single buffered']
    #allocation7 [shape = 's32[1]{0}', space=sflag, size = 0x4, scoped, tag = 'scoped memory for tpu_custom_call.1']
    #allocation8 [shape = 'u8[16384]{0}', space=vmem, size = 0x4000, scoped, tag = 'input window, operand 2, single buffered']
    #allocation9 [shape = 'u8[16384]{0}', space=vmem, size = 0x4000, scoped, tag = 'input window, operand 3, single buffered']
    #allocation10 [shape = 's32[1]{0}', space=sflag, size = 0x4, scoped, tag = 'scoped memory for tpu_custom_call.1']
    #allocation11 [shape = 'u8[16384]{0}', space=vmem, size = 0x4000, scoped, tag = 'input window, operand 4, single buffered']
    #allocation12 [shape = 'u8[1024]{0}', space=vmem, size = 0x400, scoped, tag = 'output window, operand 0']
    %12 = vsyncpa [#allocation4], 0
    %s13 = scalar_lea.sflag [#allocation4], 1
    %14 = vsyncpa %s13, 0
    %15 = vsyncpa [#allocation7], 0
    %16 = vsyncpa [#allocation10], 0
    %17 = vsyncpa [#allocation5], 0
    %s18 = scalar_lea.sflag [#allocation5], 1
    %19 = vsyncpa %s18, 0
    loop: start=0, step=1, limit=4
    $region2: #{tpu_custom_call.1} parent=1 // loop_pre_header
      _
    $region3: #{tpu_custom_call.1} parent=1 // loop_header
      %s21 = sphi 0, %s25
      %p22 = scmp.ge.s32.totalorder %s21, 4
      %s31 = sphi 0, %s33
      %s34 = sphi 0, %s31
      %s35 = sphi 0, %s34
      %s51 = sphi 0, %s35
      %s55 = sphi 0, %s55
      %s57 = sphi 0, %s55
      %s58 = sphi 0, %s57
      %s72 = sphi 0, %s58
      %s76 = sphi 0, %s76
      %s78 = sphi 0, %s76
      %s79 = sphi 0, %s78
      %s93 = sphi 0, %s79
      %s97 = sphi 0, %s97
      %s99 = sphi 0, %s97
      %s100 = sphi 0, %s99
      %s114 = sphi 0, %s100
      %s118 = sphi 0, %s118
      %s120 = sphi 0, %s118
      %s121 = sphi 0, %s120
      %s135 = sphi 0, %s121
      %s139 = sphi 0, %s139
      %s141 = sphi 0, %s139
      %s142 = sphi 0, %s141
      %s156 = sphi 0, %s142
      %s162 = sphi 0, %s164
      %s165 = sphi 0, %s162
      %s166 = sphi 0, %s165
      %s182 = sphi 0, %s166
    $region4: #{tpu_custom_call.1} parent=1 // loop_header_branch
      %24 = sbr.rel (%p22) target = $region8
    $region5: #{tpu_custom_call.1} parent=1 // loop_body
      %s26 = ssub.s32 %s21, 1
      %s27 = ssub.s32 %s21, 2
      %s28 = sadd.s32 %s21, 1
      %s29 = ssub.s32 %s21, %s28
      %p30 = scmp.eq.s32.totalorder %s29, 0
      %s32 = sadd.s32 %s31, 1
      %s33 = scalar_select %p30, %s31, %s32
      %p36 = pneg %p30
      %p37 = scmp.eq.s32.totalorder %s21, 1
      %p38 = por %p36, %p37
      %p39 = scmp.ne.s32.totalorder %s31, %s34
      %p40 = scmp.eq.s32.totalorder %s21, 0
      %p41 = por %p39, %p40
      %p42 = scmp.ne.s32.totalorder %s31, %s34
      %p43 = scmp.eq.s32.totalorder %s26, 1
      %p44 = por %p42, %p43
      %p45 = scmp.ne.s32.totalorder %s34, %s35
      %p46 = scmp.eq.s32.totalorder %s26, 0
      %p47 = por %p45, %p46
      %p48 = scmp.ne.s32.totalorder %s34, %s35
      %p49 = scmp.eq.s32.totalorder %s27, 1
      %p50 = por %p48, %p49
      %p52 = scmp.ne.s32.totalorder %s35, %s51
      %p53 = scmp.eq.s32.totalorder %s27, 0
      %p54 = por %p52, %p53
      %s56 = sadd.s32 %s55, 1
      %p59 = scmp.eq.s32.totalorder %s21, 1
      %p60 = scmp.ne.s32.totalorder %s55, %s57
      %p61 = scmp.eq.s32.totalorder %s21, 0
      %p62 = por %p60, %p61
      %p63 = scmp.ne.s32.totalorder %s55, %s57
      %p64 = scmp.eq.s32.totalorder %s26, 1
      %p65 = por %p63, %p64
      %p66 = scmp.ne.s32.totalorder %s57, %s58
      %p67 = scmp.eq.s32.totalorder %s26, 0
      %p68 = por %p66, %p67
      %p69 = scmp.ne.s32.totalorder %s57, %s58
      %p70 = scmp.eq.s32.totalorder %s27, 1
      %p71 = por %p69, %p70
      %p73 = scmp.ne.s32.totalorder %s58, %s72
      %p74 = scmp.eq.s32.totalorder %s27, 0
      %p75 = por %p73, %p74
      %s77 = sadd.s32 %s76, 1
      %p80 = scmp.eq.s32.totalorder %s21, 1
      %p81 = scmp.ne.s32.totalorder %s76, %s78
      %p82 = scmp.eq.s32.totalorder %s21, 0
      %p83 = por %p81, %p82
      %p84 = scmp.ne.s32.totalorder %s76, %s78
      %p85 = scmp.eq.s32.totalorder %s26, 1
      %p86 = por %p84, %p85
      %p87 = scmp.ne.s32.totalorder %s78, %s79
      %p88 = scmp.eq.s32.totalorder %s26, 0
      %p89 = por %p87, %p88
      %p90 = scmp.ne.s32.totalorder %s78, %s79
      %p91 = scmp.eq.s32.totalorder %s27, 1
      %p92 = por %p90, %p91
      %p94 = scmp.ne.s32.totalorder %s79, %s93
      %p95 = scmp.eq.s32.totalorder %s27, 0
      %p96 = por %p94, %p95
      %s98 = sadd.s32 %s97, 1
      %p101 = scmp.eq.s32.totalorder %s21, 1
      %p102 = scmp.ne.s32.totalorder %s97, %s99
      %p103 = scmp.eq.s32.totalorder %s21, 0
      %p104 = por %p102, %p103
      %p105 = scmp.ne.s32.totalorder %s97, %s99
      %p106 = scmp.eq.s32.totalorder %s26, 1
      %p107 = por %p105, %p106
      %p108 = scmp.ne.s32.totalorder %s99, %s100
      %p109 = scmp.eq.s32.totalorder %s26, 0
      %p110 = por %p108, %p109
      %p111 = scmp.ne.s32.totalorder %s99, %s100
      %p112 = scmp.eq.s32.totalorder %s27, 1
      %p113 = por %p111, %p112
      %p115 = scmp.ne.s32.totalorder %s100, %s114
      %p116 = scmp.eq.s32.totalorder %s27, 0
      %p117 = por %p115, %p116
      %s119 = sadd.s32 %s118, 1
      %p122 = scmp.eq.s32.totalorder %s21, 1
      %p123 = scmp.ne.s32.totalorder %s118, %s120
      %p124 = scmp.eq.s32.totalorder %s21, 0
      %p125 = por %p123, %p124
      %p126 = scmp.ne.s32.totalorder %s118, %s120
      %p127 = scmp.eq.s32.totalorder %s26, 1
      %p128 = por %p126, %p127
      %p129 = scmp.ne.s32.totalorder %s120, %s121
      %p130 = scmp.eq.s32.totalorder %s26, 0
      %p131 = por %p129, %p130
      %p132 = scmp.ne.s32.totalorder %s120, %s121
      %p133 = scmp.eq.s32.totalorder %s27, 1
      %p134 = por %p132, %p133
      %p136 = scmp.ne.s32.totalorder %s121, %s135
      %p137 = scmp.eq.s32.totalorder %s27, 0
      %p138 = por %p136, %p137
      %s140 = sadd.s32 %s139, 1
      %p143 = scmp.eq.s32.totalorder %s21, 1
      %p144 = scmp.ne.s32.totalorder %s139, %s141
      %p145 = scmp.eq.s32.totalorder %s21, 0
      %p146 = por %p144, %p145
      %p147 = scmp.ne.s32.totalorder %s139, %s141
      %p148 = scmp.eq.s32.totalorder %s26, 1
      %p149 = por %p147, %p148
      %p150 = scmp.ne.s32.totalorder %s141, %s142
      %p151 = scmp.eq.s32.totalorder %s26, 0
      %p152 = por %p150, %p151
      %p153 = scmp.ne.s32.totalorder %s141, %s142
      %p154 = scmp.eq.s32.totalorder %s27, 1
      %p155 = por %p153, %p154
      %p157 = scmp.ne.s32.totalorder %s142, %s156
      %p158 = scmp.eq.s32.totalorder %s27, 0
      %p159 = por %p157, %p158
      %s160 = ssub.s32 %s21, %s28
      %p161 = scmp.eq.s32.totalorder %s160, 0
      %s163 = sadd.s32 %s162, 1
      %s164 = scalar_select %p161, %s162, %s163
      %p167 = pneg %p161
      %p168 = scmp.eq.s32.totalorder %s21, 1
      %p169 = por %p167, %p168
      %p170 = scmp.ne.s32.totalorder %s162, %s165
      %p171 = scmp.eq.s32.totalorder %s21, 0
      %p172 = por %p170, %p171
      %p173 = scmp.ne.s32.totalorder %s162, %s165
      %p174 = scmp.eq.s32.totalorder %s26, 1
      %p175 = por %p173, %p174
      %p176 = scmp.ne.s32.totalorder %s165, %s166
      %p177 = scmp.eq.s32.totalorder %s26, 0
      %p178 = por %p176, %p177
      %p179 = scmp.ne.s32.totalorder %s165, %s166
      %p180 = scmp.eq.s32.totalorder %s27, 1
      %p181 = por %p179, %p180
      %p183 = scmp.ne.s32.totalorder %s166, %s182
      %p184 = scmp.eq.s32.totalorder %s27, 0
      %p185 = por %p183, %p184
      %p186 = scmp.le.s32.totalorder 1, %s21
      %p187 = scmp.lt.s32.totalorder %s21, 3
      %p188 = pnand %p186, %p187
      %p189 = pneg %p188
      // Predicated region
      $region9: #{tpu_custom_call.1} parent=5 // pred_check
        _
      $region10: #{tpu_custom_call.1} parent=5 // pred_check_branch
        %191 = sbr.rel (%p188) target = $region12
      $region11: #{tpu_custom_call.1} parent=5 // pred_region
        %s192 = ssub.s32 %s21, 1
        // Predicated region
        $region13: #{tpu_custom_call.1} parent=11 // pred_check
          %p193 = pneg %p68
        $region14: #{tpu_custom_call.1} parent=11 // pred_check_branch
          %195 = sbr.rel (%p193) target = $region16
        $region15: #{tpu_custom_call.1} parent=11 // pred_region
          %s197 = ssub.s32 512, 512
          %198 = vsyncadd [#allocation7], %s197
          %s199 = sshll.u32 [#allocation6], 4
          %s200 = int_to_ptr.vmem [resolvable:$true] %s199
          %205 = dma.hbm_to_vmem [thread:$0]  %s1, 512, %s200, [#allocation7], 128, 128, 8
        $region16: #{tpu_custom_call.1} parent=11 // pred_fallthru
          _
        // Predicated region
        $region17: #{tpu_custom_call.1} parent=11 // pred_check
          %p206 = pneg %p89
        $region18: #{tpu_custom_call.1} parent=11 // pred_check_branch
          %208 = sbr.rel (%p206) target = $region20
        $region19: #{tpu_custom_call.1} parent=11 // pred_region
          %s210 = ssub.s32 512, 512
          %211 = vsyncadd [#allocation7], %s210
          %s212 = sshll.u32 [#allocation8], 4
          %s213 = int_to_ptr.vmem [resolvable:$true] %s212
          %218 = dma.hbm_to_vmem [thread:$0]  %s2, 512, %s213, [#allocation7], 128, 128, 8
        $region20: #{tpu_custom_call.1} parent=11 // pred_fallthru
          _
        // Predicated region
        $region21: #{tpu_custom_call.1} parent=11 // pred_check
          %p219 = pneg %p110
        $region22: #{tpu_custom_call.1} parent=11 // pred_check_branch
          %221 = sbr.rel (%p219) target = $region24
        $region23: #{tpu_custom_call.1} parent=11 // pred_region
          %s223 = ssub.s32 512, 512
          %224 = vsyncadd [#allocation10], %s223
          %s225 = sshll.u32 [#allocation9], 4
          %s226 = int_to_ptr.vmem [resolvable:$true] %s225
          %231 = dma.hbm_to_vmem [thread:$0]  %s3, 512, %s226, [#allocation10], 128, 128, 8
        $region24: #{tpu_custom_call.1} parent=11 // pred_fallthru
          _
        // Predicated region
        $region25: #{tpu_custom_call.1} parent=11 // pred_check
          %p232 = pneg %p131
        $region26: #{tpu_custom_call.1} parent=11 // pred_check_branch
          %234 = sbr.rel (%p232) target = $region28
        $region27: #{tpu_custom_call.1} parent=11 // pred_region
          %s236 = ssub.s32 512, 512
          %237 = vsyncadd [#allocation10], %s236
          %s238 = sshll.u32 [#allocation11], 4
          %s239 = int_to_ptr.vmem [resolvable:$true] %s238
          %244 = dma.hbm_to_vmem [thread:$0]  %s4, 512, %s239, [#allocation10], 128, 128, 8
        $region28: #{tpu_custom_call.1} parent=11 // pred_fallthru
          _
        // Predicated region
        $region29: #{tpu_custom_call.1} parent=11 // pred_check
          %p245 = pneg %p152
        $region30: #{tpu_custom_call.1} parent=11 // pred_check_branch
          %247 = sbr.rel (%p245) target = $region32
        $region31: #{tpu_custom_call.1} parent=11 // pred_region
          _
        $region32: #{tpu_custom_call.1} parent=11 // pred_fallthru
          _
      $region12: #{tpu_custom_call.1} parent=5 // pred_fallthru
        _
      %p248 = scmp.lt.s32.totalorder %s21, 2
      // Predicated region
      $region33: #{tpu_custom_call.1} parent=5 // pred_check
        %p249 = pneg %p248
      $region34: #{tpu_custom_call.1} parent=5 // pred_check_branch
        %251 = sbr.rel (%p249) target = $region36
      $region35: #{tpu_custom_call.1} parent=5 // pred_region
        // Predicated region
        $region37: #{tpu_custom_call.1} parent=35 // pred_check
          %p252 = pneg %p41
        $region38: #{tpu_custom_call.1} parent=35 // pred_check_branch
          %254 = sbr.rel (%p252) target = $region40
        $region39: #{tpu_custom_call.1} parent=35 // pred_region
          %s255 = sand.u32 %s31, 1
          %s256 = scalar_lea.sflag [#allocation4], %s255
          %s257 = sand.u32 %s31, 1
          %s258 = smul.addr %s257, 2
          %s259 = scalar_lea.vmem [#allocation3], %s258
          %s261 = ssub.s32 32, 32
          %262 = vsyncadd %s256, %s261
          %s263 = smul.addr %s21, 32
          %s264 = scalar_lea.hbm %s0, %s263
          %s266 = sshll.u32 %s259, 4
          %s267 = int_to_ptr.vmem [resolvable:$true] %s266
          %269 = dma.hbm_to_vmem [thread:$0]  %s264, 32, %s267, %s256
        $region40: #{tpu_custom_call.1} parent=35 // pred_fallthru
          _
      $region36: #{tpu_custom_call.1} parent=5 // pred_fallthru
        _
      %p270 = scmp.le.s32.totalorder 1, %s21
      %p271 = scmp.lt.s32.totalorder %s21, 3
      %p272 = pnand %p270, %p271
      %p273 = pneg %p272
      // Predicated region
      $region41: #{tpu_custom_call.1} parent=5 // pred_check
        _
      $region42: #{tpu_custom_call.1} parent=5 // pred_check_branch
        %275 = sbr.rel (%p272) target = $region44
      $region43: #{tpu_custom_call.1} parent=5 // pred_region
        %s276 = ssub.s32 %s21, 1
        %s277 = sand.u32 %s34, 1
        %s278 = scalar_lea.sflag [#allocation4], %s277
        %s279 = sand.u32 %s34, 1
        %s280 = smul.addr %s279, 2
        %s281 = scalar_lea.vmem [#allocation3], %s280
        // Predicated region
        $region45: #{tpu_custom_call.1} parent=43 // pred_check
          %p282 = pneg %p47
        $region46: #{tpu_custom_call.1} parent=43 // pred_check_branch
          %284 = sbr.rel (%p282) target = $region48
        $region47: #{tpu_custom_call.1} parent=43 // pred_region
          %285 = dma.done %s278, 32
        $region48: #{tpu_custom_call.1} parent=43 // pred_fallthru
          _
        // Predicated region
        $region49: #{tpu_custom_call.1} parent=43 // pred_check
          %p286 = pneg %p68
        $region50: #{tpu_custom_call.1} parent=43 // pred_check_branch
          %288 = sbr.rel (%p286) target = $region52
        $region51: #{tpu_custom_call.1} parent=43 // pred_region
          %289 = dma.done [#allocation7], 512
        $region52: #{tpu_custom_call.1} parent=43 // pred_fallthru
          _
        // Predicated region
        $region53: #{tpu_custom_call.1} parent=43 // pred_check
          %p290 = pneg %p89
        $region54: #{tpu_custom_call.1} parent=43 // pred_check_branch
          %292 = sbr.rel (%p290) target = $region56
        $region55: #{tpu_custom_call.1} parent=43 // pred_region
          %293 = dma.done [#allocation7], 512
        $region56: #{tpu_custom_call.1} parent=43 // pred_fallthru
          _
        // Predicated region
        $region57: #{tpu_custom_call.1} parent=43 // pred_check
          %p294 = pneg %p110
        $region58: #{tpu_custom_call.1} parent=43 // pred_check_branch
          %296 = sbr.rel (%p294) target = $region60
        $region59: #{tpu_custom_call.1} parent=43 // pred_region
          %297 = dma.done [#allocation10], 512
        $region60: #{tpu_custom_call.1} parent=43 // pred_fallthru
          _
        // Predicated region
        $region61: #{tpu_custom_call.1} parent=43 // pred_check
          %p298 = pneg %p131
        $region62: #{tpu_custom_call.1} parent=43 // pred_check_branch
          %300 = sbr.rel (%p298) target = $region64
        $region63: #{tpu_custom_call.1} parent=43 // pred_region
          %301 = dma.done [#allocation10], 512
        $region64: #{tpu_custom_call.1} parent=43 // pred_fallthru
          _
        %s302 = sand.u32 %s34, 1
        %s303 = scalar_lea.sflag [#allocation4], %s302
        %s304 = sand.u32 %s34, 1
        %s305 = smul.addr %s304, 2
        %s306 = scalar_lea.vmem [#allocation3], %s305
        %p307 = pneg %p47
        %p308 = pneg %p44
        %p309 = pneg %p68
        %p310 = pneg %p65
        %p311 = pneg %p89
        %p312 = pneg %p86
        %p313 = pneg %p110
        %p314 = pneg %p107
        %p315 = pneg %p131
        %p316 = pneg %p128
        %p317 = pneg %p152
        %p318 = pneg %p149
        %p319 = pneg %p178
        %p320 = pneg %p175
        %s321 = sand.u32 %s165, 1
        %s322 = scalar_lea.sflag [#allocation5], %s321
        %s323 = sand.u32 %s165, 1
        %s324 = scalar_lea.vmem [#allocation12], %s323
        %v325 = vld [vmem:[%s281] sm:$0x3]
        %v326 = vld [vmem:[#allocation6] sm:$0xff]
        %v327 = vld [vmem:[#allocation6 + $0x8] sm:$0xff]
        %v328 = vld [vmem:[#allocation6 + $0x10] sm:$0xff]
        %v329 = vld [vmem:[#allocation6 + $0x18] sm:$0xff]
        %v330 = vlaneseq
        %v331 = vshrl.u32 %v330, 7
        %v332 = vsub.s32 0, %v331
        %v333 = vrot.slane %v325, %v332
        %v334 = vmul.f32 %v326, %v333
        %v335 = vmul.f32 %v327, %v333
        %v336 = vmul.f32 %v328, %v333
        %v337 = vmul.f32 %v329, %v333
        %v338 = vld [vmem:[#allocation8] sm:$0xff]
        %v339 = vld [vmem:[#allocation8 + $0x8] sm:$0xff]
        %v340 = vld [vmem:[#allocation8 + $0x10] sm:$0xff]
        %v341 = vld [vmem:[#allocation8 + $0x18] sm:$0xff]
        %v342 = vlaneseq
        %v343 = vshrl.u32 %v342, 7
        %v344 = vsub.s32 1, %v343
        %v345 = vrot.slane %v325, %v344
        %v346 = vmul.f32 %v338, %v345
        %v347 = vmul.f32 %v339, %v345
        %v348 = vmul.f32 %v340, %v345
        %v349 = vmul.f32 %v341, %v345
        %v350 = vadd.f32 %v334, %v346
        %v351 = vadd.f32 %v335, %v347
        %v352 = vadd.f32 %v336, %v348
        %v353 = vadd.f32 %v337, %v349
        %v354 = vld [vmem:[#allocation9] sm:$0xff]
        %v355 = vld [vmem:[#allocation9 + $0x8] sm:$0xff]
        %v356 = vld [vmem:[#allocation9 + $0x10] sm:$0xff]
        %v357 = vld [vmem:[#allocation9 + $0x18] sm:$0xff]
        %v358 = vadd.f32 %v350, %v354
        %v359 = vadd.f32 %v351, %v355
        %v360 = vadd.f32 %v352, %v356
        %v361 = vadd.f32 %v353, %v357
        %v362 = vtanh.pop %v358
        %v363 = vtanh.pop %v359
        %v364 = vtanh.pop %v360
        %v365 = vtanh.pop %v361
        %v366 = vld [vmem:[#allocation11] sm:$0xff]
        %v367 = vld [vmem:[#allocation11 + $0x8] sm:$0xff]
        %v368 = vld [vmem:[#allocation11 + $0x10] sm:$0xff]
        %v369 = vld [vmem:[#allocation11 + $0x18] sm:$0xff]
        %v370 = vmul.f32 %v362, %v366
        %v371 = vmul.f32 %v363, %v367
        %v372 = vmul.f32 %v364, %v368
        %v373 = vmul.f32 %v365, %v369
        %v374 = vadd.f32 %v370, %v371
        %v375 = vadd.f32 %v374, %v372
        %v376 = vadd.f32 %v375, %v373
        %v377 = vrot.slane %v376, 4
        %v378 = vadd.f32 %v376, %v377
        %v379 = vrot.slane %v378, 2
        %v380 = vadd.f32 %v378, %v379
        %v381 = vrot.slane %v380, 1
        %v382 = vadd.f32 %v380, %v381
        %s383 = sld [smem:[#allocation2]]
        %v384 = vstv %s383
        %v385 = vadd.f32 %v382, %v384
        %v386 = vxor.u32 %v385, 2147483648
        %v387 = vmul.f32 %v386, 1.442695
        %v388 = vpow.pop %v387
        %v389 = vadd.f32 %v388, 1.0
        %v390 = vrcp.pop %v389
        %v391 = vmul.f32 1.0, %v390
        %392 = vst [vmem:[%s324] sm:$0x1] %v391
        %s393 = sand.u32 %s165, 1
        %s394 = scalar_lea.sflag [#allocation5], %s393
        %s395 = sand.u32 %s165, 1
        %s396 = scalar_lea.vmem [#allocation12], %s395
        // Predicated region
        $region65: #{tpu_custom_call.1} parent=43 // pred_check
          %p397 = pneg %p175
        $region66: #{tpu_custom_call.1} parent=43 // pred_check_branch
          %399 = sbr.rel (%p397) target = $region68
        $region67: #{tpu_custom_call.1} parent=43 // pred_region
          %s401 = ssub.s32 16, 16
          %402 = vsyncadd %s394, %s401
          %s403 = smul.addr %s26, 16
          %s404 = scalar_lea.hbm %s6, %s403
          %s406 = sshll.u32 %s396, 4
          %s407 = int_to_ptr.vmem [resolvable:$true] %s406
          %409 = dma.vmem_to_hbm [thread:$0]  %s407, 16, %s404, %s394
        $region68: #{tpu_custom_call.1} parent=43 // pred_fallthru
          _
      $region44: #{tpu_custom_call.1} parent=5 // pred_fallthru
        _
      %p410 = scmp.le.s32.totalorder 2, %s21
      // Predicated region
      $region69: #{tpu_custom_call.1} parent=5 // pred_check
        %p411 = pneg %p410
      $region70: #{tpu_custom_call.1} parent=5 // pred_check_branch
        %413 = sbr.rel (%p411) target = $region72
      $region71: #{tpu_custom_call.1} parent=5 // pred_region
        %s414 = ssub.s32 %s21, 2
        // Predicated region
        $region73: #{tpu_custom_call.1} parent=71 // pred_check
          %p415 = pneg %p181
        $region74: #{tpu_custom_call.1} parent=71 // pred_check_branch
          %417 = sbr.rel (%p415) target = $region76
        $region75: #{tpu_custom_call.1} parent=71 // pred_region
          %s418 = sand.u32 %s166, 1
          %s419 = scalar_lea.sflag [#allocation5], %s418
          %s420 = sand.u32 %s166, 1
          %s421 = scalar_lea.vmem [#allocation12], %s420
          %422 = dma.done %s419, 16
        $region76: #{tpu_custom_call.1} parent=71 // pred_fallthru
          _
      $region72: #{tpu_custom_call.1} parent=5 // pred_fallthru
        _
    $region6: #{tpu_custom_call.1} parent=1 // loop_footer
      %s25 = sadd.s32 1, %s21
    $region7: #{tpu_custom_call.1} parent=1 // loop_footer_branch
      %20 = sbr.rel target = $region3
    $region8: #{tpu_custom_call.1} parent=1 // loop_exit
      _
    %423 = vsyncpa [#allocation4], 1
    %s424 = scalar_lea.sflag [#allocation4], 1
    %425 = vsyncpa %s424, 1
    %426 = vsyncpa [#allocation7], 1
    %427 = vsyncpa [#allocation10], 1
    %428 = vsyncpa [#allocation5], 1
    %s429 = scalar_lea.sflag [#allocation5], 1
    %430 = vsyncpa %s429, 1

</llo_original>
